<compile_context>
chip_gen: v7x
topology: tpu7x:2x2x1
jax: 0.10.0
libtpu: 0.0.40
codegen_flags: <defaults>
</compile_context>

<pallas_src>
import functools

import numpy as np

import jax
import jax.numpy as jnp
from jax.experimental import pallas as pl
from jax.experimental.pallas import tpu as pltpu

_NEG_BIG = -1e30  # exp(_NEG_BIG - mx) underflows to exactly 0 in f32


def _round_up(v, m):
    return (v + m - 1) // m * m


# -----------------------------------------------------------------------------
# Kernel
# -----------------------------------------------------------------------------
def _nested_ce_kernel(x_ref, y_ref, *rest, log_eps, inv_b, num_classes,
                      rule_cfg, use_mxu):
    if use_mxu:
        grp_ref, keep_ref, loss_ref = rest
    else:
        (loss_ref,) = rest

    i = pl.program_id(1)                              # inner (reduction) axis

    x = x_ref[...]
    if x.dtype != jnp.float32:
        x = x.astype(jnp.float32)                     # bf16 shipped, upcast in-kernel
    y = y_ref[...]                                    # (tb, 1) int32, -1 == padded row
    tb, cp = x.shape

    col = jax.lax.broadcasted_iota(jnp.int32, (1, cp), 1)
    row_valid = (y >= 0).astype(jnp.float32)          # (tb, 1)

    # Logit at the label position (shared by base and every rule).
    z_lab = jnp.sum(jnp.where(col == y, x, 0.0), axis=-1, keepdims=True)  # (tb, 1)

    def tile_ce(sel, mx, denom):
        # -sum_rows max(log softmax at the one-hot label, log eps)
        logp = (sel - mx) - jnp.log(denom)
        logp = jnp.maximum(logp, log_eps)
        return -jnp.sum(row_valid * logp, axis=0, keepdims=True)          # (1, 1)

    if not rule_cfg:
        # ---- plain cross entropy (module returns `base` when no rules) ------
        if num_classes != cp:
            xm = jnp.where(col < num_classes, x, _NEG_BIG)
        else:
            xm = x
        mx = jnp.max(xm, axis=-1, keepdims=True)
        denom = jnp.sum(jnp.exp(xm - mx), axis=-1, keepdims=True)
        partial = inv_b * tile_ce(z_lab, mx, denom)
    else:
        # ---- weighted rule losses only (module drops `base` when rules set) -
        partial = jnp.zeros((1, 1), jnp.float32)
        for r, (scale, groups) in enumerate(rule_cfg):
            ng = len(groups)
            if use_mxu:
                grpm = grp_ref[r]                     # (cp, gpad) 0/1 f32
                keepm = keep_ref[r]                   # (1, cp)    0/1 f32 (col_valid baked)
                S = jnp.dot(x, grpm, preferred_element_type=jnp.float32)   # (tb, gpad)
                gv = jax.lax.broadcasted_iota(jnp.int32, (1, S.shape[-1]), 1) < ng
                Sm = jnp.where(gv, S, _NEG_BIG)
                xk = jnp.where(keepm > 0.5, x, _NEG_BIG)
                mx = jnp.maximum(jnp.max(xk, axis=-1, keepdims=True),
                                 jnp.max(Sm, axis=-1, keepdims=True))
                denom = (jnp.sum(jnp.exp(xk - mx), axis=-1, keepdims=True)
                         + jnp.sum(jnp.exp(Sm - mx), axis=-1, keepdims=True))
                onehot = jnp.where(col == y, 1.0, 0.0)
                L = jnp.dot(onehot, grpm, preferred_element_type=jnp.float32)
                sel_grp = jnp.sum(L * S, axis=-1, keepdims=True)
                lab_tot = jnp.sum(L, axis=-1, keepdims=True)
            else:
                # Masks rebuilt from iota vs. static class indices (no inputs).
                keep = col < num_classes              # (1, cp) bool
                s_list, l_list = [], []
                for members in groups:
                    gm = (col == members[0])
                    for m in members[1:]:
                        gm = gm | (col == m)
                    keep = keep & jnp.logical_not(gm)
                    s_list.append(jnp.sum(jnp.where(gm, x, 0.0),
                                          axis=-1, keepdims=True))          # (tb, 1)
                    lm = (y == members[0])
                    for m in members[1:]:
                        lm = lm | (y == m)
                    l_list.append(lm.astype(jnp.float32))                    # (tb, 1)
                xk = jnp.where(keep, x, _NEG_BIG)
                mx = jnp.max(xk, axis=-1, keepdims=True)
                for s_g in s_list:
                    mx = jnp.maximum(mx, s_g)
                denom = jnp.sum(jnp.exp(xk - mx), axis=-1, keepdims=True)
                sel_grp = jnp.zeros_like(mx)
                lab_tot = jnp.zeros_like(mx)
                for s_g, l_g in zip(s_list, l_list):
                    denom = denom + jnp.exp(s_g - mx)
                    sel_grp = sel_grp + l_g * s_g
                    lab_tot = lab_tot + l_g
            kept_at_label = jnp.maximum(0.0, 1.0 - lab_tot)
            sel = z_lab * kept_at_label + sel_grp
            partial = partial + (scale * inv_b) * tile_ce(sel, mx, denom)

    @pl.when(i == 0)
    def _init():
        loss_ref[...] = jnp.zeros_like(loss_ref)

    loss_ref[...] += partial                           # broadcast (1,1) -> (1,8,128)


# -----------------------------------------------------------------------------
# Wrapper
# -----------------------------------------------------------------------------
def nested_cross_entropy_loss(x, y, rules=None, eps=1e-32, block_rows=None,
                              mxu_group_threshold=8):
    """Pallas TPU NestedCrossEntropyLoss.forward (by_index=True)."""
    x = jnp.asarray(x)
    if x.dtype not in (jnp.float32, jnp.bfloat16):
        x = x.astype(jnp.float32)
    y = jnp.asarray(y, jnp.int32)
    batch, num_classes = x.shape
    cp = _round_up(num_classes, 128)                  # lane-aligned class dim

    # ---- static rule config (baked into the kernel at trace time) -----------
    rule_cfg = ()
    use_mxu = False
    max_g = 0
    if rules:
        total_w = sum(float(r["weight"]) for r in rules)
        rule_cfg = tuple(
            (float(r["weight"]) / total_w,
             tuple(tuple(int(c) for c in grp) for grp in r["index"]))
            for r in rules)
        max_g = max((len(groups) for _, groups in rule_cfg), default=0)
        use_mxu = max_g >= mxu_group_threshold

    # ---- adaptive row tile under a conservative VMEM budget ------------------
    if block_rows is not None:
        tb = _round_up(max(int(block_rows), 8), 8)
    else:
        live_passes = 6                               # 2x double-buffered in + ~4 live temps
        budget = 12 * 1024 * 1024
        tb = budget // (live_passes * 4 * cp)
        tb = max(8, min(2048, tb))
    tb = min(tb, _round_up(batch, 8))
    tb = _round_up(tb, 8)

    # ---- pad columns to 128 lanes, pad rows to the tile grid -----------------
    if cp != num_classes:
        x = jnp.pad(x, ((0, 0), (0, cp - num_classes)))
    num_tiles = (batch + tb - 1) // tb
    n_par = 2 if num_tiles >= 2 else 1                # v7x: 2 TensorCores
    tiles_total = _round_up(num_tiles, n_par)
    tpc = tiles_total // n_par                        # tiles per core
    padded_rows = tiles_total * tb
    if padded_rows != batch:
        x = jnp.pad(x, ((0, padded_rows - batch), (0, 0)))
        y = jnp.pad(y, ((0, padded_rows - batch),), constant_values=-1)
    y2 = y.reshape(padded_rows, 1)

    # ---- optional MXU-path inputs (only for rules with many groups) ----------
    extra_inputs = ()
    extra_specs = []
    g_pad = 0
    if use_mxu:
        g_pad = _round_up(max_g, 128)
        n_rules = len(rule_cfg)
        grp_np = np.zeros((n_rules, cp, g_pad), np.float32)
        keep_np = np.zeros((n_rules, 1, cp), np.float32)
        keep_np[:, 0, :num_classes] = 1.0
        for r, (_, groups) in enumerate(rule_cfg):
            for g, members in enumerate(groups):
                for m in members:
                    grp_np[r, m, g] = 1.0
                    keep_np[r, 0, m] = 0.0
        extra_inputs = (jnp.asarray(grp_np), jnp.asarray(keep_np))
        extra_specs = [
            pl.BlockSpec((n_rules, cp, g_pad), lambda p, i: (0, 0, 0)),
            pl.BlockSpec((n_rules, 1, cp), lambda p, i: (0, 0, 0)),
        ]

    kernel = functools.partial(
        _nested_ce_kernel,
        log_eps=float(np.log(max(float(eps), 1e-45))),
        inv_b=1.0 / batch,
        num_classes=num_classes,
        rule_cfg=rule_cfg,
        use_mxu=use_mxu)

    n_terms = max(len(rule_cfg), 1)
    mxu_flops = 4 * padded_rows * cp * g_pad * len(rule_cfg) if use_mxu else 0
    cost = pl.CostEstimate(
        flops=int(10 * padded_rows * cp * n_terms + mxu_flops),
        transcendentals=int(padded_rows * (cp * n_terms + n_terms)),
        bytes_accessed=int(x.size * x.dtype.itemsize + y2.size * 4
                           + sum(int(a.size) * 4 for a in extra_inputs)
                           + n_par * 8 * 128 * 4))

    out = pl.pallas_call(
        kernel,
        out_shape=jax.ShapeDtypeStruct((n_par, 8, 128), jnp.float32),
        grid_spec=pltpu.PrefetchScalarGridSpec(
            num_scalar_prefetch=0,
            grid=(n_par, tpc),
            in_specs=[
                pl.BlockSpec((tb, cp), lambda p, i: (p * tpc + i, 0)),
                pl.BlockSpec((tb, 1), lambda p, i: (p * tpc + i, 0)),
                *extra_specs,
            ],
            out_specs=pl.BlockSpec((1, 8, 128), lambda p, i: (p, 0, 0)),
        ),
        compiler_params=pltpu.CompilerParams(
            dimension_semantics=("parallel", "arbitrary"),
            vmem_limit_bytes=32 * 1024 * 1024),
        cost_estimate=cost,
    )(x, y2, *extra_inputs)
    return jnp.sum(out[:, 0, 0])


# -----------------------------------------------------------------------------
# Pure-JAX reference mirroring the PyTorch module
# -----------------------------------------------------------------------------
def nested_cross_entropy_loss_ref(x, y, rules=None, eps=1e-32):
    x = jnp.asarray(x, jnp.float32)
    num_classes = x.shape[-1]
    y1 = jax.nn.one_hot(y, num_classes, dtype=jnp.float32)

    def calc_ce(logits, labels):
        p = jax.nn.softmax(logits, axis=-1)
        return -jnp.sum(labels * jnp.log(jnp.maximum(p, eps))) / logits.shape[0]

    def sumup(t, idx_groups):
        drop = {int(i) for g in idx_groups for i in g}
        rest = [c for c in range(t.shape[-1]) if c not in drop]
        parts = [t[..., rest]]
        for g in idx_groups:
            parts.append(jnp.sum(t[..., list(g)], axis=-1, keepdims=True))
        return jnp.concatenate(parts, axis=-1)

    base = calc_ce(x, y1)
    if not rules:
        return base
    total_w = 0.0
    ll = []
    for rule in rules:
        nx = sumup(x, rule["index"])
        ny = sumup(y1, rule["index"])
        ll.append(calc_ce(nx, ny) * rule["weight"])
        total_w += rule["weight"]
    return jnp.sum(jnp.stack(ll)) / total_w


if __name__ == "__main__":
    k0, k1, k2, k3 = jax.random.split(jax.random.PRNGKey(0), 4)

    # ---- small rules config: in-kernel iota masks, 2 row tiles, 2-way split --
    B, C = 16, 8
    x = jax.random.normal(k0, (B, C), jnp.float32)
    y = jax.random.randint(k1, (B,), 0, C, dtype=jnp.int32)
    rules = [{"index": [[2, 3], [4, 5]], "weight": 0.5},
             {"index": [[0, 1, 2]], "weight": 1.0}]
    out_r = jax.block_until_ready(
        nested_cross_entropy_loss(x, y, rules=rules, block_rows=8))
    ref_r = jax.block_until_ready(nested_cross_entropy_loss_ref(x, y, rules=rules))
    assert jnp.allclose(out_r, ref_r, atol=1e-4, rtol=1e-4), (out_r, ref_r)

    # ---- base path (no rules), batch not a multiple of the row tile ----------
    xb, yb = x[:13], y[:13]
    out_b = jax.block_until_ready(nested_cross_entropy_loss(xb, yb, block_rows=8))
    ref_b = jax.block_until_ready(nested_cross_entropy_loss_ref(xb, yb))
    assert jnp.allclose(out_b, ref_b, atol=1e-4, rtol=1e-4), (out_b, ref_b)

    # ---- many-group rule -> MXU group-sum path --------------------------------
    C2 = 40
    x2 = jax.random.normal(k2, (B, C2), jnp.float32)
    y_m = jax.random.randint(k3, (B,), 0, C2, dtype=jnp.int32)
    rules2 = [{"index": [[2 * g, 2 * g + 1] for g in range(10)], "weight": 1.0},
              {"index": [[30, 31, 32]], "weight": 0.5}]
    out_m = jax.block_until_ready(
        nested_cross_entropy_loss(x2, y_m, rules=rules2))
    ref_m = jax.block_until_ready(
        nested_cross_entropy_loss_ref(x2, y_m, rules=rules2))
    assert jnp.allclose(out_m, ref_m, atol=1e-4, rtol=1e-4), (out_m, ref_m)

    # ---- bf16 logits (upcast happens in-kernel) --------------------------------
    x16 = x.astype(jnp.bfloat16)
    out_h = jax.block_until_ready(nested_cross_entropy_loss(x16, y))
    ref_h = jax.block_until_ready(nested_cross_entropy_loss_ref(x16, y))
    assert jnp.allclose(out_h, ref_h, atol=1e-3, rtol=1e-3), (out_h, ref_h)

    print("KERNEL_OK")
</pallas_src>

<mosaic_0001>
module attributes {stable_mosaic.version = 11 : i64} {
  func.func @_nested_ce_kernel(%arg0: i32, %arg1: i32, %arg2: memref<8x128xf32, #tpu.memory_space<vmem>>, %arg3: memref<8x1xi32, #tpu.memory_space<vmem>>, %arg4: memref<1x8x128xf32, #tpu.memory_space<vmem>>) attributes {dimension_semantics = [#tpu.dimension_semantics<parallel>, #tpu.dimension_semantics<arbitrary>], iteration_bounds = array<i64: 2, 1>, scalar_prefetch = 0 : i64, scratch_operands = 0 : i64, tpu.core_type = #tpu.core_type<tc>, window_params = [{transform_indices = @transform_0, window_bounds = array<i64: 8, 128>}, {transform_indices = @transform_1, window_bounds = array<i64: 8, 1>}, {transform_indices = @transform_2, window_bounds = array<i64: 1, 8, 128>}]} {
    %c0 = arith.constant 0 : index
    %c0_0 = arith.constant 0 : index
    %0 = vector.load %arg2[%c0, %c0_0] : memref<8x128xf32, #tpu.memory_space<vmem>>, vector<8x128xf32>
    %c0_1 = arith.constant 0 : index
    %c0_2 = arith.constant 0 : index
    %1 = vector.load %arg3[%c0_1, %c0_2] : memref<8x1xi32, #tpu.memory_space<vmem>>, vector<8x1xi32>
    %2 = tpu.iota {dimensions = array<i32: 1>} : vector<1x128xi32>
    %c0_i32 = arith.constant 0 : i32
    %3 = vector.broadcast %c0_i32 : i32 to vector<8x1xi32>
    %4 = arith.cmpi sge, %1, %3 : vector<8x1xi32>
    %5 = arith.extui %4 : vector<8x1xi1> to vector<8x1xi32>
    %6 = arith.sitofp %5 : vector<8x1xi32> to vector<8x1xf32>
    %7 = vector.broadcast %2 : vector<1x128xi32> to vector<8x128xi32>
    %8 = vector.broadcast %1 : vector<8x1xi32> to vector<8x128xi32>
    %9 = arith.cmpi eq, %7, %8 : vector<8x128xi32>
    %cst = arith.constant 0.000000e+00 : f32
    %10 = vector.broadcast %cst : f32 to vector<8x128xf32>
    %11 = arith.select %9, %0, %10 : vector<8x128xi1>, vector<8x128xf32>
    %cst_3 = arith.constant dense<0.000000e+00> : vector<8xf32>
    %12 = vector.multi_reduction <add>, %11, %cst_3 [1] : vector<8x128xf32> to vector<8xf32>
    %13 = vector.shape_cast %12 : vector<8xf32> to vector<8x1xf32>
    %cst_4 = arith.constant 0.000000e+00 : f32
    %14 = vector.broadcast %cst_4 : f32 to vector<1x1xf32>
    %c8_i32 = arith.constant 8 : i32
    %15 = vector.broadcast %c8_i32 : i32 to vector<1x128xi32>
    %16 = arith.cmpi slt, %2, %15 : vector<1x128xi32>
    %c2_i32 = arith.constant 2 : i32
    %17 = vector.broadcast %c2_i32 : i32 to vector<1x128xi32>
    %18 = arith.cmpi eq, %2, %17 : vector<1x128xi32>
    %c3_i32 = arith.constant 3 : i32
    %19 = vector.broadcast %c3_i32 : i32 to vector<1x128xi32>
    %20 = arith.cmpi eq, %2, %19 : vector<1x128xi32>
    %21 = arith.ori %18, %20 : vector<1x128xi1>
    %cst_5 = arith.constant dense<true> : vector<1x128xi1>
    %22 = arith.xori %21, %cst_5 : vector<1x128xi1>
    %23 = arith.andi %16, %22 : vector<1x128xi1>
    %cst_6 = arith.constant 0.000000e+00 : f32
    %24 = vector.shape_cast %21 : vector<1x128xi1> to vector<1x128xi1>
    %25 = vector.broadcast %24 : vector<1x128xi1> to vector<8x128xi1>
    %26 = vector.broadcast %cst_6 : f32 to vector<8x128xf32>
    %27 = arith.select %25, %0, %26 : vector<8x128xi1>, vector<8x128xf32>
    %cst_7 = arith.constant dense<0.000000e+00> : vector<8xf32>
    %28 = vector.multi_reduction <add>, %27, %cst_7 [1] : vector<8x128xf32> to vector<8xf32>
    %29 = vector.shape_cast %28 : vector<8xf32> to vector<8x1xf32>
    %c2_i32_8 = arith.constant 2 : i32
    %30 = vector.broadcast %c2_i32_8 : i32 to vector<8x1xi32>
    %31 = arith.cmpi eq, %1, %30 : vector<8x1xi32>
    %c3_i32_9 = arith.constant 3 : i32
    %32 = vector.broadcast %c3_i32_9 : i32 to vector<8x1xi32>
    %33 = arith.cmpi eq, %1, %32 : vector<8x1xi32>
    %34 = arith.ori %31, %33 : vector<8x1xi1>
    %35 = arith.extui %34 : vector<8x1xi1> to vector<8x1xi32>
    %36 = arith.sitofp %35 : vector<8x1xi32> to vector<8x1xf32>
    %c4_i32 = arith.constant 4 : i32
    %37 = vector.broadcast %c4_i32 : i32 to vector<1x128xi32>
    %38 = arith.cmpi eq, %2, %37 : vector<1x128xi32>
    %c5_i32 = arith.constant 5 : i32
    %39 = vector.broadcast %c5_i32 : i32 to vector<1x128xi32>
    %40 = arith.cmpi eq, %2, %39 : vector<1x128xi32>
    %41 = arith.ori %38, %40 : vector<1x128xi1>
    %cst_10 = arith.constant dense<true> : vector<1x128xi1>
    %42 = arith.xori %41, %cst_10 : vector<1x128xi1>
    %43 = arith.andi %23, %42 : vector<1x128xi1>
    %cst_11 = arith.constant 0.000000e+00 : f32
    %44 = vector.shape_cast %41 : vector<1x128xi1> to vector<1x128xi1>
    %45 = vector.broadcast %44 : vector<1x128xi1> to vector<8x128xi1>
    %46 = vector.broadcast %cst_11 : f32 to vector<8x128xf32>
    %47 = arith.select %45, %0, %46 : vector<8x128xi1>, vector<8x128xf32>
    %cst_12 = arith.constant dense<0.000000e+00> : vector<8xf32>
    %48 = vector.multi_reduction <add>, %47, %cst_12 [1] : vector<8x128xf32> to vector<8xf32>
    %49 = vector.shape_cast %48 : vector<8xf32> to vector<8x1xf32>
    %c4_i32_13 = arith.constant 4 : i32
    %50 = vector.broadcast %c4_i32_13 : i32 to vector<8x1xi32>
    %51 = arith.cmpi eq, %1, %50 : vector<8x1xi32>
    %c5_i32_14 = arith.constant 5 : i32
    %52 = vector.broadcast %c5_i32_14 : i32 to vector<8x1xi32>
    %53 = arith.cmpi eq, %1, %52 : vector<8x1xi32>
    %54 = arith.ori %51, %53 : vector<8x1xi1>
    %55 = arith.extui %54 : vector<8x1xi1> to vector<8x1xi32>
    %56 = arith.sitofp %55 : vector<8x1xi32> to vector<8x1xf32>
    %cst_15 = arith.constant -1.000000e+30 : f32
    %57 = vector.shape_cast %43 : vector<1x128xi1> to vector<1x128xi1>
    %58 = vector.broadcast %57 : vector<1x128xi1> to vector<8x128xi1>
    %59 = vector.broadcast %cst_15 : f32 to vector<8x128xf32>
    %60 = arith.select %58, %0, %59 : vector<8x128xi1>, vector<8x128xf32>
    %cst_16 = arith.constant dense<0xFF800000> : vector<8xf32>
    %61 = vector.multi_reduction <maximumf>, %60, %cst_16 [1] : vector<8x128xf32> to vector<8xf32>
    %62 = vector.shape_cast %61 : vector<8xf32> to vector<8x1xf32>
    %63 = arith.maximumf %62, %29 : vector<8x1xf32>
    %64 = arith.maximumf %63, %49 : vector<8x1xf32>
    %65 = vector.broadcast %64 : vector<8x1xf32> to vector<8x128xf32>
    %66 = arith.subf %60, %65 : vector<8x128xf32>
    %67 = math.exp %66 : vector<8x128xf32>
    %cst_17 = arith.constant dense<0.000000e+00> : vector<8xf32>
    %68 = vector.multi_reduction <add>, %67, %cst_17 [1] : vector<8x128xf32> to vector<8xf32>
    %69 = vector.shape_cast %68 : vector<8xf32> to vector<8x1xf32>
    %cst_18 = arith.constant 0.000000e+00 : f32
    %70 = vector.broadcast %cst_18 : f32 to vector<8x1xf32>
    %cst_19 = arith.constant 0.000000e+00 : f32
    %71 = vector.broadcast %cst_19 : f32 to vector<8x1xf32>
    %72 = arith.subf %29, %64 : vector<8x1xf32>
    %73 = math.exp %72 : vector<8x1xf32>
    %74 = arith.addf %69, %73 : vector<8x1xf32>
    %75 = arith.mulf %36, %29 : vector<8x1xf32>
    %76 = arith.addf %70, %75 : vector<8x1xf32>
    %77 = arith.addf %71, %36 : vector<8x1xf32>
    %78 = arith.subf %49, %64 : vector<8x1xf32>
    %79 = math.exp %78 : vector<8x1xf32>
    %80 = arith.addf %74, %79 : vector<8x1xf32>
    %81 = arith.mulf %56, %49 : vector<8x1xf32>
    %82 = arith.addf %76, %81 : vector<8x1xf32>
    %83 = arith.addf %77, %56 : vector<8x1xf32>
    %cst_20 = arith.constant 1.000000e+00 : f32
    %84 = vector.broadcast %cst_20 : f32 to vector<8x1xf32>
    %85 = arith.subf %84, %83 : vector<8x1xf32>
    %cst_21 = arith.constant 0.000000e+00 : f32
    %86 = vector.broadcast %cst_21 : f32 to vector<8x1xf32>
    %87 = arith.maximumf %86, %85 : vector<8x1xf32>
    %88 = arith.mulf %13, %87 : vector<8x1xf32>
    %89 = arith.addf %88, %82 : vector<8x1xf32>
    %90 = arith.subf %89, %64 : vector<8x1xf32>
    %91 = math.log %80 : vector<8x1xf32>
    %92 = arith.subf %90, %91 : vector<8x1xf32>
    %cst_22 = arith.constant -73.6827239 : f32
    %93 = vector.broadcast %cst_22 : f32 to vector<8x1xf32>
    %94 = arith.maximumf %92, %93 : vector<8x1xf32>
    %95 = arith.mulf %6, %94 : vector<8x1xf32>
    %cst_23 = arith.constant dense<0.000000e+00> : vector<1xf32>
    %96 = vector.multi_reduction <add>, %95, %cst_23 [0] : vector<8x1xf32> to vector<1xf32>
    %97 = vector.shape_cast %96 : vector<1xf32> to vector<1x1xf32>
    %cst_24 = arith.constant 0.000000e+00 : f32
    %98 = vector.broadcast %cst_24 : f32 to vector<1x1xf32>
    %99 = arith.subf %98, %97 : vector<1x1xf32>
    %cst_25 = arith.constant 0.020833334 : f32
    %100 = vector.broadcast %cst_25 : f32 to vector<1x1xf32>
    %101 = arith.mulf %100, %99 : vector<1x1xf32>
    %102 = arith.addf %14, %101 : vector<1x1xf32>
    %c8_i32_26 = arith.constant 8 : i32
    %103 = vector.broadcast %c8_i32_26 : i32 to vector<1x128xi32>
    %104 = arith.cmpi slt, %2, %103 : vector<1x128xi32>
    %c0_i32_27 = arith.constant 0 : i32
    %105 = vector.broadcast %c0_i32_27 : i32 to vector<1x128xi32>
    %106 = arith.cmpi eq, %2, %105 : vector<1x128xi32>
    %c1_i32 = arith.constant 1 : i32
    %107 = vector.broadcast %c1_i32 : i32 to vector<1x128xi32>
    %108 = arith.cmpi eq, %2, %107 : vector<1x128xi32>
    %109 = arith.ori %106, %108 : vector<1x128xi1>
    %c2_i32_28 = arith.constant 2 : i32
    %110 = vector.broadcast %c2_i32_28 : i32 to vector<1x128xi32>
    %111 = arith.cmpi eq, %2, %110 : vector<1x128xi32>
    %112 = arith.ori %109, %111 : vector<1x128xi1>
    %cst_29 = arith.constant dense<true> : vector<1x128xi1>
    %113 = arith.xori %112, %cst_29 : vector<1x128xi1>
    %114 = arith.andi %104, %113 : vector<1x128xi1>
    %cst_30 = arith.constant 0.000000e+00 : f32
    %115 = vector.shape_cast %112 : vector<1x128xi1> to vector<1x128xi1>
    %116 = vector.broadcast %115 : vector<1x128xi1> to vector<8x128xi1>
    %117 = vector.broadcast %cst_30 : f32 to vector<8x128xf32>
    %118 = arith.select %116, %0, %117 : vector<8x128xi1>, vector<8x128xf32>
    %cst_31 = arith.constant dense<0.000000e+00> : vector<8xf32>
    %119 = vector.multi_reduction <add>, %118, %cst_31 [1] : vector<8x128xf32> to vector<8xf32>
    %120 = vector.shape_cast %119 : vector<8xf32> to vector<8x1xf32>
    %c0_i32_32 = arith.constant 0 : i32
    %121 = vector.broadcast %c0_i32_32 : i32 to vector<8x1xi32>
    %122 = arith.cmpi eq, %1, %121 : vector<8x1xi32>
    %c1_i32_33 = arith.constant 1 : i32
    %123 = vector.broadcast %c1_i32_33 : i32 to vector<8x1xi32>
    %124 = arith.cmpi eq, %1, %123 : vector<8x1xi32>
    %125 = arith.ori %122, %124 : vector<8x1xi1>
    %c2_i32_34 = arith.constant 2 : i32
    %126 = vector.broadcast %c2_i32_34 : i32 to vector<8x1xi32>
    %127 = arith.cmpi eq, %1, %126 : vector<8x1xi32>
    %128 = arith.ori %125, %127 : vector<8x1xi1>
    %129 = arith.extui %128 : vector<8x1xi1> to vector<8x1xi32>
    %130 = arith.sitofp %129 : vector<8x1xi32> to vector<8x1xf32>
    %cst_35 = arith.constant -1.000000e+30 : f32
    %131 = vector.shape_cast %114 : vector<1x128xi1> to vector<1x128xi1>
    %132 = vector.broadcast %131 : vector<1x128xi1> to vector<8x128xi1>
    %133 = vector.broadcast %cst_35 : f32 to vector<8x128xf32>
    %134 = arith.select %132, %0, %133 : vector<8x128xi1>, vector<8x128xf32>
    %cst_36 = arith.constant dense<0xFF800000> : vector<8xf32>
    %135 = vector.multi_reduction <maximumf>, %134, %cst_36 [1] : vector<8x128xf32> to vector<8xf32>
    %136 = vector.shape_cast %135 : vector<8xf32> to vector<8x1xf32>
    %137 = arith.maximumf %136, %120 : vector<8x1xf32>
    %138 = vector.broadcast %137 : vector<8x1xf32> to vector<8x128xf32>
    %139 = arith.subf %134, %138 : vector<8x128xf32>
    %140 = math.exp %139 : vector<8x128xf32>
    %cst_37 = arith.constant dense<0.000000e+00> : vector<8xf32>
    %141 = vector.multi_reduction <add>, %140, %cst_37 [1] : vector<8x128xf32> to vector<8xf32>
    %142 = vector.shape_cast %141 : vector<8xf32> to vector<8x1xf32>
    %cst_38 = arith.constant 0.000000e+00 : f32
    %143 = vector.broadcast %cst_38 : f32 to vector<8x1xf32>
    %cst_39 = arith.constant 0.000000e+00 : f32
    %144 = vector.broadcast %cst_39 : f32 to vector<8x1xf32>
    %145 = arith.subf %120, %137 : vector<8x1xf32>
    %146 = math.exp %145 : vector<8x1xf32>
    %147 = arith.addf %142, %146 : vector<8x1xf32>
    %148 = arith.mulf %130, %120 : vector<8x1xf32>
    %149 = arith.addf %143, %148 : vector<8x1xf32>
    %150 = arith.addf %144, %130 : vector<8x1xf32>
    %cst_40 = arith.constant 1.000000e+00 : f32
    %151 = vector.broadcast %cst_40 : f32 to vector<8x1xf32>
    %152 = arith.subf %151, %150 : vector<8x1xf32>
    %cst_41 = arith.constant 0.000000e+00 : f32
    %153 = vector.broadcast %cst_41 : f32 to vector<8x1xf32>
    %154 = arith.maximumf %153, %152 : vector<8x1xf32>
    %155 = arith.mulf %13, %154 : vector<8x1xf32>
    %156 = arith.addf %155, %149 : vector<8x1xf32>
    %157 = arith.subf %156, %137 : vector<8x1xf32>
    %158 = math.log %147 : vector<8x1xf32>
    %159 = arith.subf %157, %158 : vector<8x1xf32>
    %cst_42 = arith.constant -73.6827239 : f32
    %160 = vector.broadcast %cst_42 : f32 to vector<8x1xf32>
    %161 = arith.maximumf %159, %160 : vector<8x1xf32>
    %162 = arith.mulf %6, %161 : vector<8x1xf32>
    %cst_43 = arith.constant dense<0.000000e+00> : vector<1xf32>
    %163 = vector.multi_reduction <add>, %162, %cst_43 [0] : vector<8x1xf32> to vector<1xf32>
    %164 = vector.shape_cast %163 : vector<1xf32> to vector<1x1xf32>
    %cst_44 = arith.constant 0.000000e+00 : f32
    %165 = vector.broadcast %cst_44 : f32 to vector<1x1xf32>
    %166 = arith.subf %165, %164 : vector<1x1xf32>
    %cst_45 = arith.constant 0.0416666679 : f32
    %167 = vector.broadcast %cst_45 : f32 to vector<1x1xf32>
    %168 = arith.mulf %167, %166 : vector<1x1xf32>
    %169 = arith.addf %102, %168 : vector<1x1xf32>
    %c0_i32_46 = arith.constant 0 : i32
    %170 = arith.cmpi eq, %arg1, %c0_i32_46 : i32
    %171 = arith.extui %170 : i1 to i32
    %c0_i32_47 = arith.constant 0 : i32
    %172 = arith.cmpi ne, %171, %c0_i32_47 : i32
    scf.if %172 {
      %cst_54 = arith.constant 0.000000e+00 : f32
      %178 = vector.broadcast %cst_54 : f32 to vector<1x8x128xf32>
      %c0_55 = arith.constant 0 : index
      %c0_56 = arith.constant 0 : index
      %c0_57 = arith.constant 0 : index
      %179 = vector.load %arg4[%c0_55, %c0_56, %c0_57] : memref<1x8x128xf32, #tpu.memory_space<vmem>>, vector<1x8x128xf32>
      tpu.vector_store %arg4[%c0_55, %c0_56, %c0_57], %178 {strides = array<i32>} : memref<1x8x128xf32, #tpu.memory_space<vmem>>, vector<1x8x128xf32>,
    } else {
    }
    %c0_48 = arith.constant 0 : index
    %c0_49 = arith.constant 0 : index
    %c0_50 = arith.constant 0 : index
    %173 = vector.load %arg4[%c0_48, %c0_49, %c0_50] : memref<1x8x128xf32, #tpu.memory_space<vmem>>, vector<1x8x128xf32>
    %174 = vector.shape_cast %169 : vector<1x1xf32> to vector<1x1x1xf32>
    %175 = vector.broadcast %174 : vector<1x1x1xf32> to vector<1x8x128xf32>
    %176 = arith.addf %173, %175 : vector<1x8x128xf32>
    %c0_51 = arith.constant 0 : index
    %c0_52 = arith.constant 0 : index
    %c0_53 = arith.constant 0 : index
    %177 = vector.load %arg4[%c0_51, %c0_52, %c0_53] : memref<1x8x128xf32, #tpu.memory_space<vmem>>, vector<1x8x128xf32>
    tpu.vector_store %arg4[%c0_51, %c0_52, %c0_53], %176 {strides = array<i32>} : memref<1x8x128xf32, #tpu.memory_space<vmem>>, vector<1x8x128xf32>,
    return
  }
  func.func @transform_0(%arg0: i32, %arg1: i32) -> (i32, i32) {
    %c1_i32 = arith.constant 1 : i32
    %0 = arith.muli %arg0, %c1_i32 : i32
    %1 = arith.addi %0, %arg1 : i32
    %c0_i32 = arith.constant 0 : i32
    %c0_i32_0 = arith.constant 0 : i32
    return %1, %c0_i32 : i32, i32
  }
  func.func @transform_1(%arg0: i32, %arg1: i32) -> (i32, i32) {
    %c1_i32 = arith.constant 1 : i32
    %0 = arith.muli %arg0, %c1_i32 : i32
    %1 = arith.addi %0, %arg1 : i32
    %c0_i32 = arith.constant 0 : i32
    %c0_i32_0 = arith.constant 0 : i32
    return %1, %c0_i32 : i32, i32
  }
  func.func @transform_2(%arg0: i32, %arg1: i32) -> (i32, i32, i32) {
    %c0_i32 = arith.constant 0 : i32
    %c0_i32_0 = arith.constant 0 : i32
    %c0_i32_1 = arith.constant 0 : i32
    return %arg0, %c0_i32, %c0_i32_0 : i32, i32, i32
  }
}

</mosaic_0001>

<llo_original>
// kernel: tpu_custom_call.1
$region0: #{tpu_custom_call.1}
  #allocation0 [shape = 'u32[]', space=smem, size = 0x4, offset = 0x4, fixed_abs, tag = 'smem constant byte address 0x4 - core index']
  #allocation1 [shape = 'u32[144,128]{1,0:T(1,128)}', space=vmem, size = 0x12000, scoped, tag = 'internal scratch']
  %s0 = inlined_call_operand.vmem [shape: f32[16,128], index: 0, kind: input, shape index: {}]
  %s1 = inlined_call_operand.vmem [shape: s32[16,1], index: 1, kind: input, shape index: {}]
  %s2 = inlined_call_operand.hbm [shape: f32[2,8,128], index: 2, kind: output, shape index: {}]
  %s3 = sld [smem:[#allocation0]]
  $region45: #{tpu_custom_call.1} parent=0
    _
  %s5 = ssub.s32 1, %s3
  %s6 = scalar_select 0, %s5, %s3
  $region1: #{tpu_custom_call.1} parent=0
    #allocation2 [shape = 'u8[8192]{0}', space=vmem, size = 0x2000, scoped, tag = 'output window, operand 0']
    #allocation3 [shape = 's32[2]{0}', space=sflag, size = 0x8, scoped, tag = 'scoped memory for tpu_custom_call.1']
    %7 = vsyncpa [#allocation3], 0
    %s8 = scalar_lea.sflag [#allocation3], 1
    %9 = vsyncpa %s8, 0
    loop: start=0, step=1, limit=4
    $region2: #{tpu_custom_call.1} parent=1 // loop_pre_header
      _
    $region3: #{tpu_custom_call.1} parent=1 // loop_header
      %s11 = sphi 0, %s15
      %p12 = scmp.ge.s32.totalorder %s11, 4
      %s18 = sphi 0, %s30
      %s19 = sphi 0, %s26
      %s20 = sphi 0, %s18
      %s21 = sphi 0, %s19
      %s22 = sphi 0, %s20
      %s23 = sphi 0, %s21
      %s35 = sphi 0, %s37
      %s38 = sphi 0, %s35
      %s39 = sphi 0, %s38
      %s55 = sphi 0, %s39
      %s63 = sphi 0, %s65
      %s66 = sphi 0, %s63
      %s67 = sphi 0, %s66
      %s83 = sphi 0, %s67
      %s89 = sphi 0, %s91
      %s92 = sphi 0, %s89
      %s93 = sphi 0, %s92
      %s109 = sphi 0, %s93
    $region4: #{tpu_custom_call.1} parent=1 // loop_header_branch
      %14 = sbr.rel (%p12) target = $region8
    $region5: #{tpu_custom_call.1} parent=1 // loop_body
      %s16 = ssub.s32 %s11, 1
      %s17 = ssub.s32 %s11, 2
      %s24 = sadd.s32 1, %s19
      %p25 = scmp.ge.s32.totalorder %s24, 1
      %s26 = scalar_select %p25, 0, %s24
      %s27 = sadd.s32 1, %s18
      %s28 = scalar_select %p25, %s27, %s18
      %p29 = scmp.ge.s32.totalorder %s28, 2
      %s30 = scalar_select %p29, 0, %s28
      %s31 = sadd.s32 %s18, %s19
      %s32 = sadd.s32 %s30, %s26
      %s33 = ssub.s32 %s31, %s32
      %p34 = scmp.eq.s32.totalorder %s33, 0
      %s36 = sadd.s32 %s35, 1
      %s37 = scalar_select %p34, %s35, %s36
      %p40 = pneg %p34
      %p41 = scmp.eq.s32.totalorder %s11, 1
      %p42 = por %p40, %p41
      %p43 = scmp.ne.s32.totalorder %s35, %s38
      %p44 = scmp.eq.s32.totalorder %s11, 0
      %p45 = por %p43, %p44
      %p46 = scmp.ne.s32.totalorder %s35, %s38
      %p47 = scmp.eq.s32.totalorder %s16, 1
      %p48 = por %p46, %p47
      %p49 = scmp.ne.s32.totalorder %s38, %s39
      %p50 = scmp.eq.s32.totalorder %s16, 0
      %p51 = por %p49, %p50
      %p52 = scmp.ne.s32.totalorder %s38, %s39
      %p53 = scmp.eq.s32.totalorder %s17, 1
      %p54 = por %p52, %p53
      %p56 = scmp.ne.s32.totalorder %s39, %s55
      %p57 = scmp.eq.s32.totalorder %s17, 0
      %p58 = por %p56, %p57
      %s59 = sadd.s32 %s18, %s19
      %s60 = sadd.s32 %s30, %s26
      %s61 = ssub.s32 %s59, %s60
      %p62 = scmp.eq.s32.totalorder %s61, 0
      %s64 = sadd.s32 %s63, 1
      %s65 = scalar_select %p62, %s63, %s64
      %p68 = pneg %p62
      %p69 = scmp.eq.s32.totalorder %s11, 1
      %p70 = por %p68, %p69
      %p71 = scmp.ne.s32.totalorder %s63, %s66
      %p72 = scmp.eq.s32.totalorder %s11, 0
      %p73 = por %p71, %p72
      %p74 = scmp.ne.s32.totalorder %s63, %s66
      %p75 = scmp.eq.s32.totalorder %s16, 1
      %p76 = por %p74, %p75
      %p77 = scmp.ne.s32.totalorder %s66, %s67
      %p78 = scmp.eq.s32.totalorder %s16, 0
      %p79 = por %p77, %p78
      %p80 = scmp.ne.s32.totalorder %s66, %s67
      %p81 = scmp.eq.s32.totalorder %s17, 1
      %p82 = por %p80, %p81
      %p84 = scmp.ne.s32.totalorder %s67, %s83
      %p85 = scmp.eq.s32.totalorder %s17, 0
      %p86 = por %p84, %p85
      %s87 = ssub.s32 %s18, %s30
      %p88 = scmp.eq.s32.totalorder %s87, 0
      %s90 = sadd.s32 %s89, 1
      %s91 = scalar_select %p88, %s89, %s90
      %p94 = pneg %p88
      %p95 = scmp.eq.s32.totalorder %s11, 1
      %p96 = por %p94, %p95
      %p97 = scmp.ne.s32.totalorder %s89, %s92
      %p98 = scmp.eq.s32.totalorder %s11, 0
      %p99 = por %p97, %p98
      %p100 = scmp.ne.s32.totalorder %s89, %s92
      %p101 = scmp.eq.s32.totalorder %s16, 1
      %p102 = por %p100, %p101
      %p103 = scmp.ne.s32.totalorder %s92, %s93
      %p104 = scmp.eq.s32.totalorder %s16, 0
      %p105 = por %p103, %p104
      %p106 = scmp.ne.s32.totalorder %s92, %s93
      %p107 = scmp.eq.s32.totalorder %s17, 1
      %p108 = por %p106, %p107
      %p110 = scmp.ne.s32.totalorder %s93, %s109
      %p111 = scmp.eq.s32.totalorder %s17, 0
      %p112 = por %p110, %p111
      %p113 = scmp.le.s32.totalorder 1, %s11
      %p114 = scmp.lt.s32.totalorder %s11, 3
      %p115 = pnand %p113, %p114
      %p116 = pneg %p115
      // Predicated region
      $region9: #{tpu_custom_call.1} parent=5 // pred_check
        _
      $region10: #{tpu_custom_call.1} parent=5 // pred_check_branch
        %118 = sbr.rel (%p115) target = $region12
      $region11: #{tpu_custom_call.1} parent=5 // pred_region
        %s119 = ssub.s32 %s11, 1
      $region12: #{tpu_custom_call.1} parent=5 // pred_fallthru
        _
      %p120 = scmp.lt.s32.totalorder %s11, 2
      // Predicated region
      $region13: #{tpu_custom_call.1} parent=5 // pred_check
        %p121 = pneg %p120
      $region14: #{tpu_custom_call.1} parent=5 // pred_check_branch
        %123 = sbr.rel (%p121) target = $region16
      $region15: #{tpu_custom_call.1} parent=5 // pred_region
        // Predicated region
        $region17: #{tpu_custom_call.1} parent=15 // pred_check
          %p124 = pneg %p45
        $region18: #{tpu_custom_call.1} parent=15 // pred_check_branch
          %126 = sbr.rel (%p124) target = $region20
        $region19: #{tpu_custom_call.1} parent=15 // pred_region
          %s127 = sadd.s32 %s18, %s19
          %p128 = scmp.lt.s32.totalorder %s127, 1
          %s129 = scalar_select %p128, %s127, 1
          %s130 = smul.addr %s129, 8
          %s131 = scalar_lea.vmem %s0, %s130
          %s132 = sadd.s32 %s18, %s19
        $region20: #{tpu_custom_call.1} parent=15 // pred_fallthru
          _
        // Predicated region
        $region21: #{tpu_custom_call.1} parent=15 // pred_check
          %p133 = pneg %p73
        $region22: #{tpu_custom_call.1} parent=15 // pred_check_branch
          %135 = sbr.rel (%p133) target = $region24
        $region23: #{tpu_custom_call.1} parent=15 // pred_region
          %s136 = sadd.s32 %s18, %s19
          %p137 = scmp.lt.s32.totalorder %s136, 1
          %s138 = scalar_select %p137, %s136, 1
          %s139 = smul.addr %s138, 8
          %s140 = scalar_lea.vmem %s1, %s139
          %s141 = sadd.s32 %s18, %s19
        $region24: #{tpu_custom_call.1} parent=15 // pred_fallthru
          _
      $region16: #{tpu_custom_call.1} parent=5 // pred_fallthru
        _
      %p142 = scmp.le.s32.totalorder 1, %s11
      %p143 = scmp.lt.s32.totalorder %s11, 3
      %p144 = pnand %p142, %p143
      %p145 = pneg %p144
      // Predicated region
      $region25: #{tpu_custom_call.1} parent=5 // pred_check
        _
      $region26: #{tpu_custom_call.1} parent=5 // pred_check_branch
        %147 = sbr.rel (%p144) target = $region28
      $region27: #{tpu_custom_call.1} parent=5 // pred_region
        %s148 = ssub.s32 %s11, 1
        %s149 = sadd.s32 %s20, %s21
        %p150 = scmp.lt.s32.totalorder %s149, 1
        %s151 = scalar_select %p150, %s149, 1
        %s152 = smul.addr %s151, 8
        %s153 = scalar_lea.vmem %s0, %s152
        %p154 = pneg %p51
        %p155 = pneg %p48
        %s156 = sadd.s32 %s20, %s21
        %p157 = scmp.lt.s32.totalorder %s156, 1
        %s158 = scalar_select %p157, %s156, 1
        %s159 = smul.addr %s158, 8
        %s160 = scalar_lea.vmem %s1, %s159
        %p161 = pneg %p79
        %p162 = pneg %p76
        %p163 = pneg %p105
        %p164 = pneg %p102
        %s165 = sand.u32 %s92, 1
        %s166 = scalar_lea.sflag [#allocation3], %s165
        %s167 = sand.u32 %s92, 1
        %s168 = smul.addr %s167, 8
        %s169 = scalar_lea.vmem [#allocation2], %s168
        %s170 = sadd.s32 %s20, %s21
        %p171 = scmp.lt.s32.totalorder %s170, 1
        %s172 = scalar_select %p171, %s170, 1
        %s173 = smul.addr %s172, 8
        %s174 = scalar_lea.vmem %s0, %s173
        %s175 = sadd.s32 %s20, %s21
        %s176 = sadd.s32 %s20, %s21
        %p177 = scmp.lt.s32.totalorder %s176, 1
        %s178 = scalar_select %p177, %s176, 1
        %s179 = smul.addr %s178, 8
        %s180 = scalar_lea.vmem %s1, %s179
        %s181 = sadd.s32 %s20, %s21
        %v182 = vld [vmem:[%s174] sm:$0xff]
        %v183 = vld [vmem:[%s180] sm:$0xff]
        %v184 = vlaneseq
        %v185 = vand.u32 %v184, 127
        %vm186 = vcmp.ge.s32.totalorder %v183, 0
        %v187 = vsel %vm186, 1, 0
        %v188 = vcvt.s32.f32 %v187
        %189 = vset.pattern.permute.xlu0 0
        %190 = vperm.xlu0 %189, %v183
        %v191 = vpop.permute.xlu0 %190
        %vm192 = vcmp.eq.s32.totalorder %v185, %v191
        %v193 = vsel %vm192, %v182, 0.0
        %194 = vadd.xlane.f32.xlu0 %v193
        %v195 = vpop.xlane.xlu0 %194
        %vm196 = vcmp.lt.s32.totalorder %v185, 8
        %vm197 = vcmp.eq.s32.totalorder %v185, 2
        %vm198 = vcmp.eq.s32.totalorder %v185, 3
        %vm199 = vmor %vm197, %vm198
        %vm200 = vmxor %vm199, 1
        %vm201 = vmand %vm196, %vm200
        %v202 = vsel %vm199, 1, 0
        %vm203 = vcmp.eq.s32.totalorder %v202, 1
        %v204 = vsel %vm203, %v182, 0.0
        %205 = vadd.xlane.f32.xlu0 %v204
        %v206 = vpop.xlane.xlu0 %205
        %vm207 = vcmp.eq.s32.totalorder %v183, 2
        %vm208 = vcmp.eq.s32.totalorder %v183, 3
        %vm209 = vmor %vm207, %vm208
        %v210 = vsel %vm209, 1, 0
        %v211 = vcvt.s32.f32 %v210
        %vm212 = vcmp.eq.s32.totalorder %v185, 4
        %vm213 = vcmp.eq.s32.totalorder %v185, 5
        %vm214 = vmor %vm212, %vm213
        %vm215 = vmxor %vm214, 1
        %vm216 = vmand %vm201, %vm215
        %v217 = vsel %vm214, 1, 0
        %vm218 = vcmp.eq.s32.totalorder %v217, 1
        %v219 = vsel %vm218, %v182, 0.0
        %220 = vadd.xlane.f32.xlu0 %v219
        %v221 = vpop.xlane.xlu0 %220
        %vm222 = vcmp.eq.s32.totalorder %v183, 4
        %vm223 = vcmp.eq.s32.totalorder %v183, 5
        %vm224 = vmor %vm222, %vm223
        %v225 = vsel %vm224, 1, 0
        %v226 = vcvt.s32.f32 %v225
        %v227 = vsel %vm216, 1, 0
        %vm228 = vcmp.eq.s32.totalorder %v227, 1
        %v229 = vsel %vm228, %v182, -1e+30
        %230 = vmax.xlane.f32.xlu0 %v229
        %v231 = vpop.xlane.xlu0 %230
        %v232 = vmax.f32 %v231, %v206
        %v233 = vmax.f32 %v232, %v221
        %v234 = vsub.f32 %v229, %v233
        %v235 = vmul.f32 %v234, 1.442695
        %v236 = vpow.pop %v235
        %237 = vadd.xlane.f32.xlu0 %v236
        %v238 = vpop.xlane.xlu0 %237
        %v239 = vsub.f32 %v206, %v233
        %v240 = vmul.f32 %v239, 1.442695
        %v241 = vpow.pop %v240
        %v242 = vadd.f32 %v238, %v241
        %v243 = vmul.f32 %v211, %v206
        %v244 = vadd.f32 %v243, 0.0
        %v245 = vadd.f32 %v211, 0.0
        %v246 = vsub.f32 %v221, %v233
        %v247 = vmul.f32 %v246, 1.442695
        %v248 = vpow.pop %v247
        %v249 = vadd.f32 %v242, %v248
        %v250 = vmul.f32 %v226, %v221
        %v251 = vadd.f32 %v244, %v250
        %v252 = vadd.f32 %v245, %v226
        %v253 = vsub.f32 1.0, %v252
        %v254 = vmax.f32 %v253, 0.0
        %v255 = vmul.f32 %v195, %v254
        %v256 = vadd.f32 %v255, %v251
        %v257 = vsub.f32 %v256, %v233
        %v258 = vlog2.pop %v249
        %v259 = vmul.f32 %v258, 0.6931472
        %v260 = vsub.f32 %v257, %v259
        %v261 = vmax.f32 %v260, -73.682724
        %v262 = vmul.f32 %v188, %v261
        %vm263 = vcmask 7168
        %v264 = vsel %vm263, %v262, 0.0
        %v265 = vrot.slane %v264, 4
        %v266 = vadd.f32 %v264, %v265
        %v267 = vrot.slane %v266, 2
        %v268 = vadd.f32 %v266, %v267
        %v269 = vrot.slane %v268, 1
        %v270 = vadd.f32 %v268, %v269
        %v271 = vsub.f32 0.0, %v270
        %v272 = vmul.f32 %v271, 0.020833334
        %v273 = vadd.f32 %v272, 0.0
        %vm274 = vcmp.eq.s32.totalorder %v185, 0
        %vm275 = vcmp.eq.s32.totalorder %v185, 1
        %vm276 = vmor %vm274, %vm275
        %vm277 = vmor %vm276, %vm197
        %vm278 = vmxor %vm277, 1
        %vm279 = vmand %vm196, %vm278
        %v280 = vsel %vm277, 1, 0
        %vm281 = vcmp.eq.s32.totalorder %v280, 1
        %v282 = vsel %vm281, %v182, 0.0
        %283 = vadd.xlane.f32.xlu0 %v282
        %v284 = vpop.xlane.xlu0 %283
        %vm285 = vcmp.eq.s32.totalorder %v183, 0
        %vm286 = vcmp.eq.s32.totalorder %v183, 1
        %vm287 = vmor %vm285, %vm286
        %vm288 = vmor %vm287, %vm207
        %v289 = vsel %vm288, 1, 0
        %v290 = vcvt.s32.f32 %v289
        %v291 = vsel %vm279, 1, 0
        %vm292 = vcmp.eq.s32.totalorder %v291, 1
        %v293 = vsel %vm292, %v182, -1e+30
        %294 = vmax.xlane.f32.xlu0 %v293
        %v295 = vpop.xlane.xlu0 %294
        %v296 = vmax.f32 %v295, %v284
        %v297 = vsub.f32 %v293, %v296
        %v298 = vmul.f32 %v297, 1.442695
        %v299 = vpow.pop %v298
        %300 = vadd.xlane.f32.xlu0 %v299
        %v301 = vpop.xlane.xlu0 %300
        %v302 = vsub.f32 %v284, %v296
        %v303 = vmul.f32 %v302, 1.442695
        %v304 = vpow.pop %v303
        %v305 = vadd.f32 %v301, %v304
        %v306 = vmul.f32 %v290, %v284
        %v307 = vadd.f32 %v306, 0.0
        %v308 = vadd.f32 %v290, 0.0
        %v309 = vsub.f32 1.0, %v308
        %v310 = vmax.f32 %v309, 0.0
        %v311 = vmul.f32 %v195, %v310
        %v312 = vadd.f32 %v311, %v307
        %v313 = vsub.f32 %v312, %v296
        %v314 = vlog2.pop %v305
        %v315 = vmul.f32 %v314, 0.6931472
        %v316 = vsub.f32 %v313, %v315
        %v317 = vmax.f32 %v316, -73.682724
        %v318 = vmul.f32 %v188, %v317
        %v319 = vsel %vm263, %v318, 0.0
        %v320 = vrot.slane %v319, 4
        %v321 = vadd.f32 %v319, %v320
        %v322 = vrot.slane %v321, 2
        %v323 = vadd.f32 %v321, %v322
        %v324 = vrot.slane %v323, 1
        %v325 = vadd.f32 %v323, %v324
        %v326 = vsub.f32 0.0, %v325
        %v327 = vmul.f32 %v326, 0.041666668
        %v328 = vadd.f32 %v273, %v327
        %p329 = scmp.eq.s32.totalorder %s21, 0
        // Predicated region
        $region29: #{tpu_custom_call.1} parent=27 // pred_check
          %p330 = pneg %p329
        $region30: #{tpu_custom_call.1} parent=27 // pred_check_branch
          %332 = sbr.rel (%p330) target = $region32
        $region31: #{tpu_custom_call.1} parent=27 // pred_region
          %333 = vst [vmem:[%s169] sm:$0xff] 0.0
        $region32: #{tpu_custom_call.1} parent=27 // pred_fallthru
          _
        %v334 = vld [vmem:[%s169] sm:$0xff]
        %336 = vset.pattern.permute.xlu0 0
        %337 = vperm.xlu0 %336, %v328
        %v338 = vpop.permute.xlu0 %337
        %v340 = vadd.f32 %v334, %v338
        %341 = vst [vmem:[%s169] sm:$0xff] %v340
        %s342 = sand.u32 %s92, 1
        %s343 = scalar_lea.sflag [#allocation3], %s342
        %s344 = sand.u32 %s92, 1
        %s345 = smul.addr %s344, 8
        %s346 = scalar_lea.vmem [#allocation2], %s345
        // Predicated region
        $region33: #{tpu_custom_call.1} parent=27 // pred_check
          %p347 = pneg %p102
        $region34: #{tpu_custom_call.1} parent=27 // pred_check_branch
          %349 = sbr.rel (%p347) target = $region36
        $region35: #{tpu_custom_call.1} parent=27 // pred_region
          %s351 = ssub.s32 128, 128
          %352 = vsyncadd %s343, %s351
          %s353 = smul.addr %s20, 128
          %s354 = scalar_lea.hbm %s2, %s353
          %s356 = sshll.u32 %s346, 4
          %s357 = int_to_ptr.vmem [resolvable:$true] %s356
          %359 = dma.vmem_to_hbm [thread:$0]  %s357, 128, %s354, %s343
        $region36: #{tpu_custom_call.1} parent=27 // pred_fallthru
          _
      $region28: #{tpu_custom_call.1} parent=5 // pred_fallthru
        _
      %p360 = scmp.le.s32.totalorder 2, %s11
      // Predicated region
      $region37: #{tpu_custom_call.1} parent=5 // pred_check
        %p361 = pneg %p360
      $region38: #{tpu_custom_call.1} parent=5 // pred_check_branch
        %363 = sbr.rel (%p361) target = $region40
      $region39: #{tpu_custom_call.1} parent=5 // pred_region
        %s364 = ssub.s32 %s11, 2
        // Predicated region
        $region41: #{tpu_custom_call.1} parent=39 // pred_check
          %p365 = pneg %p108
        $region42: #{tpu_custom_call.1} parent=39 // pred_check_branch
          %367 = sbr.rel (%p365) target = $region44
        $region43: #{tpu_custom_call.1} parent=39 // pred_region
          %s368 = sand.u32 %s93, 1
          %s369 = scalar_lea.sflag [#allocation3], %s368
          %s370 = sand.u32 %s93, 1
          %s371 = smul.addr %s370, 8
          %s372 = scalar_lea.vmem [#allocation2], %s371
          %373 = dma.done %s369, 128
        $region44: #{tpu_custom_call.1} parent=39 // pred_fallthru
          _
      $region40: #{tpu_custom_call.1} parent=5 // pred_fallthru
        _
    $region6: #{tpu_custom_call.1} parent=1 // loop_footer
      %s15 = sadd.s32 1, %s11
    $region7: #{tpu_custom_call.1} parent=1 // loop_footer_branch
      %10 = sbr.rel target = $region3
    $region8: #{tpu_custom_call.1} parent=1 // loop_exit
      _
    %374 = vsyncpa [#allocation3], 1
    %s375 = scalar_lea.sflag [#allocation3], 1
    %376 = vsyncpa %s375, 1

</llo_original>
